<compile_context>
chip_gen: v6e
topology: v6e:2x2x1
jax: 0.10.0
libtpu: 0.0.40
codegen_flags: <defaults>
</compile_context>

<pallas_src>
import jax
import jax.numpy as jnp
from jax.experimental import pallas as pl
from jax.experimental.pallas import tpu as pltpu
import numpy as np

# Free constants from the original program (y, x). Must satisfy X <= Y <= D.
Y_SLICE = 64
X_SLICE = 32


def _cat_slice_cat_kernel(x1_ref, x2_ref, out_ref):
    """Direct slice-store copy (no in-kernel concatenation).

    x1_ref, x2_ref : (TB, D) row tiles of the two inputs.
    out_ref        : (2, TB, D + xc); plane 0 holds the x1 rows of v1|v3,
                     plane 1 holds the x2 rows of v1|v3.

    Stores are streamed per plane so at most one full input tile's worth of
    vregs is live at any point (keeps large TB spill-free).
    """
    D = x1_ref.shape[-1]
    xc = out_ref.shape[-1] - D

    # Plane 0: rows of v1 coming from x1, plus their v3 tail.
    out_ref[0, :, :D] = x1_ref[...]          # lane-aligned full-width store
    out_ref[0, :, D:] = x1_ref[:, :xc]       # small masked tail store
    # Plane 1: rows of v1 coming from x2, plus their v3 tail.
    out_ref[1, :, :D] = x2_ref[...]
    out_ref[1, :, D:] = x2_ref[:, :xc]


def _row_tile_target():
    """Per-generation row-tile target (keeps working set under scoped VMEM)."""
    try:
        kind = jax.devices()[0].device_kind.lower()
    except Exception:
        kind = ""
    if "v5" in kind:
        return 1024   # v5e: 16 MiB scoped VMEM default -> ~6 MiB working set
    return 2048       # v6e/v7x: 32 MiB scoped default -> ~12 MiB working set


def _pick_row_tile(B, target):
    """Row tile: whole B if small, else the fixed 8-multiple target (cdiv grid)."""
    if B <= target:
        return B          # block dim equals full array dim -> always legal
    return target - (target % 8)


def cat_slice_cat(x1, x2, x3=None):
    del x3  # unused by the original module's forward
    assert x1.shape == x2.shape and x1.dtype == x2.dtype
    B, D = x1.shape
    xc = min(X_SLICE, Y_SLICE)
    assert xc <= D and Y_SLICE <= D

    TB = _pick_row_tile(B, _row_tile_target())
    grid = (pl.cdiv(B, TB),)

    itemsize = jnp.dtype(x1.dtype).itemsize
    bytes_accessed = 2 * B * D * itemsize + 2 * B * (D + xc) * itemsize

    out3 = pl.pallas_call(
        _cat_slice_cat_kernel,
        out_shape=jax.ShapeDtypeStruct((2, B, D + xc), x1.dtype),
        grid_spec=pltpu.PrefetchScalarGridSpec(
            num_scalar_prefetch=0,
            grid=grid,
            in_specs=[
                pl.BlockSpec((TB, D), lambda i: (i, 0)),
                pl.BlockSpec((TB, D), lambda i: (i, 0)),
            ],
            out_specs=pl.BlockSpec((2, TB, D + xc), lambda i: (0, i, 0)),
        ),
        compiler_params=pltpu.CompilerParams(
            dimension_semantics=("parallel",),
        ),
        cost_estimate=pl.CostEstimate(
            flops=0, transcendentals=0, bytes_accessed=bytes_accessed),
    )(x1, x2)

    # (2, B, D+xc) -> (2B, D+xc): x1 rows first, then x2 rows == torch.cat dim 0.
    return out3.reshape(2 * B, D + xc)


def _reference(x1, x2):
    v1 = jnp.concatenate([x1, x2], axis=0)
    v2 = v1[:, :Y_SLICE]
    v3 = v2[:, :X_SLICE]
    return jnp.concatenate([v1, v3], axis=1)


if __name__ == "__main__":
    key = jax.random.PRNGKey(0)
    k1, k2, k3 = jax.random.split(key, 3)
    B, D = 8, 128
    x1 = jax.random.normal(k1, (B, D), dtype=jnp.float32)
    x2 = jax.random.normal(k2, (B, D), dtype=jnp.float32)
    x3 = jax.random.normal(k3, (B, D), dtype=jnp.float32)  # unused, as in the module

    out = jax.block_until_ready(cat_slice_cat(x1, x2, x3))
    ref = jax.block_until_ready(_reference(x1, x2))

    assert out.shape == (2 * B, D + min(X_SLICE, Y_SLICE)), out.shape
    np.testing.assert_allclose(np.asarray(out), np.asarray(ref), rtol=0, atol=0)

    print("KERNEL_OK")
</pallas_src>

<mosaic_0001>
module attributes {stable_mosaic.version = 11 : i64} {
  func.func @_cat_slice_cat_kernel(%arg0: i32, %arg1: memref<8x128xf32, #tpu.memory_space<vmem>>, %arg2: memref<8x128xf32, #tpu.memory_space<vmem>>, %arg3: memref<2x8x160xf32, #tpu.memory_space<vmem>>) attributes {dimension_semantics = [#tpu.dimension_semantics<parallel>], iteration_bounds = array<i64: 1>, scalar_prefetch = 0 : i64, scratch_operands = 0 : i64, tpu.core_type = #tpu.core_type<tc>, window_params = [{transform_indices = @transform_0, window_bounds = array<i64: 8, 128>}, {transform_indices = @transform_1, window_bounds = array<i64: 8, 128>}, {transform_indices = @transform_2, window_bounds = array<i64: 2, 8, 160>}]} {
    %c0 = arith.constant 0 : index
    %c0_0 = arith.constant 0 : index
    %0 = vector.load %arg1[%c0, %c0_0] : memref<8x128xf32, #tpu.memory_space<vmem>>, vector<8x128xf32>
    %c0_1 = arith.constant 0 : index
    %c0_2 = arith.constant 0 : index
    %c0_3 = arith.constant 0 : index
    %1 = vector.load %arg3[%c0_1, %c0_2, %c0_3] : memref<2x8x160xf32, #tpu.memory_space<vmem>>, vector<1x8x128xf32>
    %2 = vector.shape_cast %1 : vector<1x8x128xf32> to vector<8x128xf32>
    %3 = vector.shape_cast %0 : vector<8x128xf32> to vector<1x8x128xf32>
    tpu.vector_store %arg3[%c0_1, %c0_2, %c0_3], %3 {strides = array<i32>} : memref<2x8x160xf32, #tpu.memory_space<vmem>>, vector<1x8x128xf32>,
    %c0_4 = arith.constant 0 : index
    %c0_5 = arith.constant 0 : index
    %4 = vector.load %arg1[%c0_4, %c0_5] : memref<8x128xf32, #tpu.memory_space<vmem>>, vector<8x32xf32>
    %c0_6 = arith.constant 0 : index
    %c0_7 = arith.constant 0 : index
    %c128 = arith.constant 128 : index
    %5 = vector.load %arg3[%c0_6, %c0_7, %c128] : memref<2x8x160xf32, #tpu.memory_space<vmem>>, vector<1x8x32xf32>
    %6 = vector.shape_cast %5 : vector<1x8x32xf32> to vector<8x32xf32>
    %7 = vector.shape_cast %4 : vector<8x32xf32> to vector<1x8x32xf32>
    tpu.vector_store %arg3[%c0_6, %c0_7, %c128], %7 {strides = array<i32>} : memref<2x8x160xf32, #tpu.memory_space<vmem>>, vector<1x8x32xf32>,
    %c0_8 = arith.constant 0 : index
    %c0_9 = arith.constant 0 : index
    %8 = vector.load %arg2[%c0_8, %c0_9] : memref<8x128xf32, #tpu.memory_space<vmem>>, vector<8x128xf32>
    %c1 = arith.constant 1 : index
    %c0_10 = arith.constant 0 : index
    %c0_11 = arith.constant 0 : index
    %9 = vector.load %arg3[%c1, %c0_10, %c0_11] : memref<2x8x160xf32, #tpu.memory_space<vmem>>, vector<1x8x128xf32>
    %10 = vector.shape_cast %9 : vector<1x8x128xf32> to vector<8x128xf32>
    %11 = vector.shape_cast %8 : vector<8x128xf32> to vector<1x8x128xf32>
    tpu.vector_store %arg3[%c1, %c0_10, %c0_11], %11 {strides = array<i32>} : memref<2x8x160xf32, #tpu.memory_space<vmem>>, vector<1x8x128xf32>,
    %c0_12 = arith.constant 0 : index
    %c0_13 = arith.constant 0 : index
    %12 = vector.load %arg2[%c0_12, %c0_13] : memref<8x128xf32, #tpu.memory_space<vmem>>, vector<8x32xf32>
    %c1_14 = arith.constant 1 : index
    %c0_15 = arith.constant 0 : index
    %c128_16 = arith.constant 128 : index
    %13 = vector.load %arg3[%c1_14, %c0_15, %c128_16] : memref<2x8x160xf32, #tpu.memory_space<vmem>>, vector<1x8x32xf32>
    %14 = vector.shape_cast %13 : vector<1x8x32xf32> to vector<8x32xf32>
    %15 = vector.shape_cast %12 : vector<8x32xf32> to vector<1x8x32xf32>
    tpu.vector_store %arg3[%c1_14, %c0_15, %c128_16], %15 {strides = array<i32>} : memref<2x8x160xf32, #tpu.memory_space<vmem>>, vector<1x8x32xf32>,
    return
  }
  func.func @transform_0(%arg0: i32) -> (i32, i32) {
    %c0_i32 = arith.constant 0 : i32
    %c0_i32_0 = arith.constant 0 : i32
    return %arg0, %c0_i32 : i32, i32
  }
  func.func @transform_1(%arg0: i32) -> (i32, i32) {
    %c0_i32 = arith.constant 0 : i32
    %c0_i32_0 = arith.constant 0 : i32
    return %arg0, %c0_i32 : i32, i32
  }
  func.func @transform_2(%arg0: i32) -> (i32, i32, i32) {
    %c0_i32 = arith.constant 0 : i32
    %c0_i32_0 = arith.constant 0 : i32
    %c0_i32_1 = arith.constant 0 : i32
    return %c0_i32, %arg0, %c0_i32_0 : i32, i32, i32
  }
}

</mosaic_0001>

<llo_original>
// kernel: tpu_custom_call.1
$region0: #{tpu_custom_call.1}
  #allocation0 [shape = 'u32[]', space=smem, size = 0x4, offset = 0x4, fixed_abs, tag = 'smem constant byte address 0x4 - core index']
  #allocation1 [shape = 'u32[144,128]{1,0:T(1,128)}', space=vmem, size = 0x12000, scoped, tag = 'internal scratch']
  %s0 = inlined_call_operand.hbm [shape: f32[8,128], index: 0, kind: input, shape index: {}]
  %s1 = inlined_call_operand.hbm [shape: f32[8,128], index: 1, kind: input, shape index: {}]
  %s2 = inlined_call_operand.hbm [shape: f32[2,8,160], index: 2, kind: output, shape index: {}]
  %s3 = sld [smem:[#allocation0]]
  $region26: #{tpu_custom_call.1} parent=0
    _
  %s5 = ssub.s32 1, %s3
  %s6 = scalar_select 0, %s5, %s3
  $region1: #{tpu_custom_call.1} parent=0
    #allocation2 [shape = 'u8[4096]{0}', space=vmem, size = 0x1000, scoped, tag = 'input window, operand 0, single buffered']
    #allocation3 [shape = 's32[1]{0}', space=sflag, size = 0x4, scoped, tag = 'scoped memory for tpu_custom_call.1']
    #allocation4 [shape = 's32[1]{0}', space=sflag, size = 0x4, scoped, tag = 'scoped memory for tpu_custom_call.1']
    #allocation5 [shape = 'u8[4096]{0}', space=vmem, size = 0x1000, scoped, tag = 'input window, operand 1, single buffered']
    #allocation6 [shape = 's32[1]{0}', space=sflag, size = 0x4, scoped, tag = 'scoped memory for tpu_custom_call.1']
    #allocation7 [shape = 'u8[16384]{0}', space=vmem, size = 0x4000, scoped, tag = 'output window, operand 0, single buffered']
    %7 = vsyncpa [#allocation3], 0
    %8 = vsyncpa [#allocation6], 0
    %9 = vsyncpa [#allocation4], 0
    // Predicated region
    $region2: #{tpu_custom_call.1} parent=1 // pred_check
      _
    $region3: #{tpu_custom_call.1} parent=1 // pred_check_branch
      %11 = sbr.rel (0) target = $region5
    $region4: #{tpu_custom_call.1} parent=1 // pred_region
      %s13 = ssub.s32 128, 128
      %14 = vsyncadd [#allocation3], %s13
      %s16 = sshll.u32 [#allocation2], 4
      %s17 = int_to_ptr.vmem [resolvable:$true] %s16
      %19 = dma.hbm_to_vmem [thread:$0]  %s0, 128, %s17, [#allocation3]
    $region5: #{tpu_custom_call.1} parent=1 // pred_fallthru
      _
    // Predicated region
    $region6: #{tpu_custom_call.1} parent=1 // pred_check
      _
    $region7: #{tpu_custom_call.1} parent=1 // pred_check_branch
      %21 = sbr.rel (0) target = $region9
    $region8: #{tpu_custom_call.1} parent=1 // pred_region
      %s23 = ssub.s32 128, 128
      %24 = vsyncadd [#allocation6], %s23
      %s26 = sshll.u32 [#allocation5], 4
      %s27 = int_to_ptr.vmem [resolvable:$true] %s26
      %29 = dma.hbm_to_vmem [thread:$0]  %s1, 128, %s27, [#allocation6]
    $region9: #{tpu_custom_call.1} parent=1 // pred_fallthru
      _
    // Predicated region
    $region10: #{tpu_custom_call.1} parent=1 // pred_check
      _
    $region11: #{tpu_custom_call.1} parent=1 // pred_check_branch
      %31 = sbr.rel (0) target = $region13
    $region12: #{tpu_custom_call.1} parent=1 // pred_region
      %32 = dma.done [#allocation3], 128
    $region13: #{tpu_custom_call.1} parent=1 // pred_fallthru
      _
    // Predicated region
    $region14: #{tpu_custom_call.1} parent=1 // pred_check
      _
    $region15: #{tpu_custom_call.1} parent=1 // pred_check_branch
      %34 = sbr.rel (0) target = $region17
    $region16: #{tpu_custom_call.1} parent=1 // pred_region
      %35 = dma.done [#allocation6], 128
    $region17: #{tpu_custom_call.1} parent=1 // pred_fallthru
      _
    %v36 = vld [vmem:[#allocation2] sm:$0xff]
    %37 = vst [vmem:[#allocation7] sm:$0xff] %v36
    %v38 = vld [vmem:[#allocation2] sm:$0xff]
    %vm39 = vcmask 261120
    %40 = vst.msk [vmem:[#allocation7 + $0x8] sm:$0xff] %vm39, %v38
    %v41 = vld [vmem:[#allocation5] sm:$0xff]
    %s42 = scalar_lea.vmem [#allocation7], 16
    %43 = vst [vmem:[%s42] sm:$0xff] %v41
    %v44 = vld [vmem:[#allocation5] sm:$0xff]
    %45 = vst.msk [vmem:[%s42 + $0x8] sm:$0xff] %vm39, %v44
    // Predicated region
    $region18: #{tpu_custom_call.1} parent=1 // pred_check
      _
    $region19: #{tpu_custom_call.1} parent=1 // pred_check_branch
      %47 = sbr.rel (0) target = $region21
    $region20: #{tpu_custom_call.1} parent=1 // pred_region
      %s49 = ssub.s32 512, 512
      %50 = vsyncadd [#allocation4], %s49
      %s51 = sshll.u32 [#allocation7], 4
      %s52 = int_to_ptr.vmem [resolvable:$true] %s51
      %57 = dma.vmem_to_hbm [thread:$0]  %s52, 512, %s2, [#allocation4], 256, 256, 16
    $region21: #{tpu_custom_call.1} parent=1 // pred_fallthru
      _
    // Predicated region
    $region22: #{tpu_custom_call.1} parent=1 // pred_check
      _
    $region23: #{tpu_custom_call.1} parent=1 // pred_check_branch
      %59 = sbr.rel (0) target = $region25
    $region24: #{tpu_custom_call.1} parent=1 // pred_region
      %60 = dma.done [#allocation4], 512
    $region25: #{tpu_custom_call.1} parent=1 // pred_fallthru
      _
    %61 = vsyncpa [#allocation3], 1
    %62 = vsyncpa [#allocation6], 1
    %63 = vsyncpa [#allocation4], 1

</llo_original>
